<compile_context>
chip_gen: v5e
topology: v5e:2x2
jax: 0.10.0
libtpu: 0.0.40
codegen_flags: <defaults>
</compile_context>

<pallas_src>
import functools
import math

import jax
import jax.numpy as jnp
from jax import lax
from jax.experimental import pallas as pl
from jax.experimental.pallas import tpu as pltpu


def _gather_scale_pe(ids_ref, lut_ref, pe_ref, *, scale):
    """Common body: one-hot MXU gather, sqrt(D) scale, PE add.  Returns (T, D) f32."""
    b = pl.program_id(1)                     # batch row handled by this step
    ids = ids_ref[b]                         # (T,) int32
    T = ids.shape[0]
    V, D = lut_ref.shape
    # One-hot gather on the MXU: (T, V) @ (V, D) -> (T, D).  Exact for 0/1 lhs
    # at HIGHEST precision.
    onehot = (ids[:, None] == lax.broadcasted_iota(jnp.int32, (T, V), 1))
    emb = jnp.dot(onehot.astype(jnp.float32), lut_ref[...],
                  preferred_element_type=jnp.float32,
                  precision=lax.Precision.HIGHEST)
    return emb * scale + pe_ref[...]


def _embed_kernel_eval(ids_ref, lut_ref, pe_ref, out_ref, *, scale):
    val = _gather_scale_pe(ids_ref, lut_ref, pe_ref, scale=scale)
    out_ref[0] = val.astype(out_ref.dtype)


def _embed_kernel_train(ids_ref, lut_ref, pe_ref, rand_ref, out_ref, *, scale, p):
    val = _gather_scale_pe(ids_ref, lut_ref, pe_ref, scale=scale)
    keep = rand_ref[0] >= p                  # P(keep) = 1 - p
    val = jnp.where(keep, val * (1.0 / (1.0 - p)), 0.0)
    out_ref[0] = val.astype(out_ref.dtype)


def make_positional_encoding(max_len, embed_dim):
    """Same construction as PositionalEncoding.__init__ (HarvardNLP)."""
    position = jnp.arange(max_len, dtype=jnp.float32)[:, None]
    div_term = jnp.exp(
        jnp.arange(0, embed_dim, 2, dtype=jnp.float32)
        * (-math.log(10000.0) / embed_dim))
    pe = jnp.zeros((max_len, embed_dim), jnp.float32)
    pe = pe.at[:, 0::2].set(jnp.sin(position * div_term))
    pe = pe.at[:, 1::2].set(jnp.cos(position * div_term))
    return pe


def embeddings_forward(token_ids, lut, pe, *, dropout_p=0.1, train=True,
                       rng_key=None):
    """Pallas equivalent of Embeddings.forward.

    token_ids: (B, S) int32
    lut:       (V, D) float32 embedding table (kept VMEM-resident)
    pe:        (>=S, D) float32 positional-encoding table
    returns:   (B, S, D) float32
    """
    B, S = token_ids.shape
    V, D = lut.shape
    token_ids = token_ids.astype(jnp.int32)
    pe_s = pe[:S]
    scale = math.sqrt(float(D))

    # Sequence tile size: multiple of 128 when possible, otherwise the whole
    # sequence, so every block satisfies the (8, 128) / full-dim constraint.
    if S % 128 == 0:
        T = min(S, 512)
    else:
        T = S
    n_tiles = pl.cdiv(S, T)
    grid = (n_tiles, B)                      # batch innermost: ids/pe/lut tiles
                                             # stay resident across it.

    ids_spec = pl.BlockSpec((B, T), lambda t, b: (0, t))
    lut_spec = pl.BlockSpec((V, D), lambda t, b: (0, 0))   # VMEM-resident LUT
    pe_spec = pl.BlockSpec((T, D), lambda t, b: (t, 0))
    out_spec = pl.BlockSpec((1, T, D), lambda t, b: (b, t, 0))
    # TODO(synk): for very large vocabularies (V*D*4 >> VMEM, esp. v7x's 64MiB)
    # keep the LUT in HBM (memory_space=pl.ANY) and gather rows with manual
    # async copies instead of the resident one-hot matmul.

    # Raise scoped VMEM above the conservative defaults, with headroom for
    # double-buffered tiles, capped well under the smallest (v7x) capacity.
    est = 4 * (V * D + 2 * (T * D + B * T + 2 * T * D))
    vmem_limit = int(min(100 * 2 ** 20, max(32 * 2 ** 20, 4 * est)))
    cparams = pltpu.CompilerParams(
        dimension_semantics=("parallel", "parallel"),
        vmem_limit_bytes=vmem_limit)

    out_shape = jax.ShapeDtypeStruct((B, S, D), jnp.float32)

    if train and dropout_p > 0.0:
        if rng_key is None:
            rng_key = jax.random.PRNGKey(0)
        rand = jax.random.uniform(rng_key, (B, S, D), dtype=jnp.float32)
        kernel = functools.partial(_embed_kernel_train, scale=scale,
                                   p=float(dropout_p))
        out = pl.pallas_call(
            kernel,
            out_shape=out_shape,
            grid=grid,
            in_specs=[ids_spec, lut_spec, pe_spec,
                      pl.BlockSpec((1, T, D), lambda t, b: (b, t, 0))],
            out_specs=out_spec,
            compiler_params=cparams,
        )(token_ids, lut, pe_s, rand)
    else:
        kernel = functools.partial(_embed_kernel_eval, scale=scale)
        out = pl.pallas_call(
            kernel,
            out_shape=out_shape,
            grid=grid,
            in_specs=[ids_spec, lut_spec, pe_spec],
            out_specs=out_spec,
            compiler_params=cparams,
        )(token_ids, lut, pe_s)
    return out


if __name__ == "__main__":
    # Small deterministic example consistent with the module:
    #   vocab_length=16, embed_dim=32, batch=2, seq=8
    VOCAB, EMBED_DIM = 16, 32
    B, S = 2, 8
    MAX_LEN = 64
    P_DROP = 0.1

    key = jax.random.PRNGKey(0)
    k_lut, k_ids, k_drop = jax.random.split(key, 3)

    lut = jax.random.normal(k_lut, (VOCAB, EMBED_DIM), dtype=jnp.float32)  # nn.Embedding ~ N(0,1)
    pe = make_positional_encoding(MAX_LEN, EMBED_DIM)
    token_ids = jax.random.randint(k_ids, (B, S), 0, VOCAB, dtype=jnp.int32)

    # Pure-JAX reference for the deterministic part (lut gather * sqrt(D) + PE).
    ref = lut[token_ids] * math.sqrt(float(EMBED_DIM)) + pe[:S][None, :, :]

    # Eval-mode forward (dropout is identity) -> must match the reference.
    out_eval = embeddings_forward(token_ids, lut, pe, dropout_p=P_DROP,
                                  train=False)
    jax.block_until_ready(out_eval)
    assert out_eval.shape == (B, S, EMBED_DIM)
    assert jnp.allclose(out_eval, ref, rtol=1e-5, atol=1e-5), "eval mismatch"

    # Training-mode forward (inverted dropout applied in-kernel).
    out_train = embeddings_forward(token_ids, lut, pe, dropout_p=P_DROP,
                                   train=True, rng_key=k_drop)
    jax.block_until_ready(out_train)
    assert out_train.shape == (B, S, EMBED_DIM)
    scaled_ref = ref / (1.0 - P_DROP)
    ok = jnp.logical_or(jnp.isclose(out_train, 0.0),
                        jnp.isclose(out_train, scaled_ref, rtol=1e-5, atol=1e-5))
    assert bool(jnp.all(ok)), "train-mode values must be 0 or ref/(1-p)"

    print("KERNEL_OK")
</pallas_src>

<mosaic_0001>
module attributes {stable_mosaic.version = 11 : i64} {
  func.func @_embed_kernel_eval(%arg0: i32, %arg1: i32, %arg2: memref<2x8xi32, #tpu.memory_space<vmem>>, %arg3: memref<16x32xf32, #tpu.memory_space<vmem>>, %arg4: memref<8x32xf32, #tpu.memory_space<vmem>>, %arg5: memref<1x8x32xf32, #tpu.memory_space<vmem>>) attributes {dimension_semantics = [#tpu.dimension_semantics<parallel>, #tpu.dimension_semantics<parallel>], iteration_bounds = array<i64: 1, 2>, scalar_prefetch = 0 : i64, scratch_operands = 0 : i64, tpu.core_type = #tpu.core_type<tc>, window_params = [{transform_indices = @transform_0, window_bounds = array<i64: 2, 8>}, {pipeline_mode = #tpu.pipeline_mode<synchronous>, transform_indices = @transform_1, window_bounds = array<i64: 16, 32>}, {transform_indices = @transform_2, window_bounds = array<i64: 8, 32>}, {transform_indices = @transform_3, window_bounds = array<i64: 1, 8, 32>}]} {
    %0 = arith.index_cast %arg1 : i32 to index
    %c0 = arith.constant 0 : index
    %1 = vector.load %arg2[%0, %c0] : memref<2x8xi32, #tpu.memory_space<vmem>>, vector<1x8xi32>
    %2 = vector.shape_cast %1 : vector<1x8xi32> to vector<8xi32>
    %3 = vector.shape_cast %2 : vector<8xi32> to vector<8x1xi32>
    %4 = tpu.iota {dimensions = array<i32: 1>} : vector<8x16xi32>
    %5 = vector.broadcast %3 : vector<8x1xi32> to vector<8x16xi32>
    %6 = arith.cmpi eq, %5, %4 : vector<8x16xi32>
    %7 = arith.extui %6 : vector<8x16xi1> to vector<8x16xi32>
    %8 = arith.sitofp %7 : vector<8x16xi32> to vector<8x16xf32>
    %c0_0 = arith.constant 0 : index
    %c0_1 = arith.constant 0 : index
    %9 = vector.load %arg3[%c0_0, %c0_1] : memref<16x32xf32, #tpu.memory_space<vmem>>, vector<16x32xf32>
    %cst = arith.constant dense<0.000000e+00> : vector<8x32xf32>
    %10 = tpu.matmul %8, %9, %cst {dimension_numbers = #tpu.dot_dimension_numbers<[1], [0], [0], [1], [0, 0, 1, 1], [], []>, precision = #tpu.contract_precision<fp32>} : vector<8x16xf32>, vector<16x32xf32>, vector<8x32xf32> -> vector<8x32xf32>
    %cst_2 = arith.constant 5.65685415 : f32
    %11 = vector.broadcast %cst_2 : f32 to vector<8x32xf32>
    %12 = arith.mulf %10, %11 : vector<8x32xf32>
    %c0_3 = arith.constant 0 : index
    %c0_4 = arith.constant 0 : index
    %13 = vector.load %arg4[%c0_3, %c0_4] : memref<8x32xf32, #tpu.memory_space<vmem>>, vector<8x32xf32>
    %14 = arith.addf %12, %13 : vector<8x32xf32>
    %c0_5 = arith.constant 0 : index
    %c0_6 = arith.constant 0 : index
    %c0_7 = arith.constant 0 : index
    %15 = vector.load %arg5[%c0_5, %c0_6, %c0_7] : memref<1x8x32xf32, #tpu.memory_space<vmem>>, vector<1x8x32xf32>
    %16 = vector.shape_cast %15 : vector<1x8x32xf32> to vector<8x32xf32>
    %17 = vector.shape_cast %14 : vector<8x32xf32> to vector<1x8x32xf32>
    tpu.vector_store %arg5[%c0_5, %c0_6, %c0_7], %17 {strides = array<i32>} : memref<1x8x32xf32, #tpu.memory_space<vmem>>, vector<1x8x32xf32>,
    return
  }
  func.func @transform_0(%arg0: i32, %arg1: i32) -> (i32, i32) {
    %c0_i32 = arith.constant 0 : i32
    %c0_i32_0 = arith.constant 0 : i32
    return %c0_i32, %arg0 : i32, i32
  }
  func.func @transform_1(%arg0: i32, %arg1: i32) -> (i32, i32) {
    %c0_i32 = arith.constant 0 : i32
    %c0_i32_0 = arith.constant 0 : i32
    %c0_i32_1 = arith.constant 0 : i32
    return %c0_i32, %c0_i32_0 : i32, i32
  }
  func.func @transform_2(%arg0: i32, %arg1: i32) -> (i32, i32) {
    %c0_i32 = arith.constant 0 : i32
    %c0_i32_0 = arith.constant 0 : i32
    return %arg0, %c0_i32 : i32, i32
  }
  func.func @transform_3(%arg0: i32, %arg1: i32) -> (i32, i32, i32) {
    %c0_i32 = arith.constant 0 : i32
    %c0_i32_0 = arith.constant 0 : i32
    return %arg1, %arg0, %c0_i32 : i32, i32, i32
  }
}

</mosaic_0001>

<llo_original>
// kernel: tpu_custom_call.1
$region0: #{tpu_custom_call.1}
  #allocation0 [shape = 'u32[]', space=smem, size = 0x4, offset = 0x4, fixed_abs, tag = 'smem constant byte address 0x4 - core index']
  #allocation1 [shape = 'u32[72,128]{1,0:T(1,128)}', space=vmem, size = 0x9000, scoped, tag = 'internal scratch']
  %s0 = inlined_call_operand.hbm [shape: s32[2,8], index: 0, kind: input, shape index: {}]
  %s1 = inlined_call_operand.hbm [shape: f32[16,32], index: 1, kind: input, shape index: {}]
  %s2 = inlined_call_operand.hbm [shape: f32[8,32], index: 2, kind: input, shape index: {}]
  %s3 = inlined_call_operand.hbm [shape: f32[2,8,32], index: 3, kind: output, shape index: {}]
  %s4 = sld [smem:[#allocation0]]
  $region57: #{tpu_custom_call.1} parent=0
    _
  %s6 = ssub.s32 1, %s4
  %s7 = scalar_select 0, %s6, %s4
  $region1: #{tpu_custom_call.1} parent=0
    #allocation2 [shape = 'u8[1024]{0}', space=vmem, size = 0x400, scoped, tag = 'input window, operand 0, single buffered']
    #allocation3 [shape = 's32[2]{0}', space=sflag, size = 0x8, scoped, tag = 'scoped memory for tpu_custom_call.1']
    #allocation4 [shape = 's32[2]{0}', space=sflag, size = 0x8, scoped, tag = 'scoped memory for tpu_custom_call.1']
    #allocation5 [shape = 'u8[8192]{0}', space=vmem, size = 0x2000, scoped, tag = 'input window, operand 1, single buffered']
    #allocation6 [shape = 's32[1]{0}', space=sflag, size = 0x4, scoped, tag = 'scoped memory for tpu_custom_call.1']
    #allocation7 [shape = 'u8[4096]{0}', space=vmem, size = 0x1000, scoped, tag = 'input window, operand 2, single buffered']
    #allocation8 [shape = 'u8[8192]{0}', space=vmem, size = 0x2000, scoped, tag = 'output window, operand 0']
    %8 = vsyncpa [#allocation3], 0
    %9 = vsyncpa [#allocation6], 0
    %10 = vsyncpa [#allocation4], 0
    %s11 = scalar_lea.sflag [#allocation4], 1
    %12 = vsyncpa %s11, 0
    loop: start=0, step=1, limit=4
    $region2: #{tpu_custom_call.1} parent=1 // loop_pre_header
      _
    $region3: #{tpu_custom_call.1} parent=1 // loop_header
      %s14 = sphi 0, %s18
      %p15 = scmp.ge.s32.totalorder %s14, 4
      %s21 = sphi 0, %s33
      %s22 = sphi 0, %s29
      %s23 = sphi 0, %s21
      %s24 = sphi 0, %s22
      %s25 = sphi 0, %s23
      %s26 = sphi 0, %s24
      %s36 = sphi 0, %s38
      %s39 = sphi 0, %s36
      %s40 = sphi 0, %s39
      %s56 = sphi 0, %s40
      %s60 = sphi 0, %s60
      %s62 = sphi 0, %s60
      %s63 = sphi 0, %s62
      %s77 = sphi 0, %s63
      %s83 = sphi 0, %s85
      %s86 = sphi 0, %s83
      %s87 = sphi 0, %s86
      %s103 = sphi 0, %s87
      %s111 = sphi 0, %s113
      %s114 = sphi 0, %s111
      %s115 = sphi 0, %s114
      %s131 = sphi 0, %s115
    $region4: #{tpu_custom_call.1} parent=1 // loop_header_branch
      %17 = sbr.rel (%p15) target = $region8
    $region5: #{tpu_custom_call.1} parent=1 // loop_body
      %s19 = ssub.s32 %s14, 1
      %s20 = ssub.s32 %s14, 2
      %s27 = sadd.s32 1, %s22
      %p28 = scmp.ge.s32.totalorder %s27, 2
      %s29 = scalar_select %p28, 0, %s27
      %s30 = sadd.s32 1, %s21
      %s31 = scalar_select %p28, %s30, %s21
      %p32 = scmp.ge.s32.totalorder %s31, 1
      %s33 = scalar_select %p32, 0, %s31
      %s34 = ssub.s32 %s21, %s33
      %p35 = scmp.eq.s32.totalorder %s34, 0
      %s37 = sadd.s32 %s36, 1
      %s38 = scalar_select %p35, %s36, %s37
      %p41 = pneg %p35
      %p42 = scmp.eq.s32.totalorder %s14, 1
      %p43 = por %p41, %p42
      %p44 = scmp.ne.s32.totalorder %s36, %s39
      %p45 = scmp.eq.s32.totalorder %s14, 0
      %p46 = por %p44, %p45
      %p47 = scmp.ne.s32.totalorder %s36, %s39
      %p48 = scmp.eq.s32.totalorder %s19, 1
      %p49 = por %p47, %p48
      %p50 = scmp.ne.s32.totalorder %s39, %s40
      %p51 = scmp.eq.s32.totalorder %s19, 0
      %p52 = por %p50, %p51
      %p53 = scmp.ne.s32.totalorder %s39, %s40
      %p54 = scmp.eq.s32.totalorder %s20, 1
      %p55 = por %p53, %p54
      %p57 = scmp.ne.s32.totalorder %s40, %s56
      %p58 = scmp.eq.s32.totalorder %s20, 0
      %p59 = por %p57, %p58
      %s61 = sadd.s32 %s60, 1
      %p64 = scmp.eq.s32.totalorder %s14, 1
      %p65 = scmp.ne.s32.totalorder %s60, %s62
      %p66 = scmp.eq.s32.totalorder %s14, 0
      %p67 = por %p65, %p66
      %p68 = scmp.ne.s32.totalorder %s60, %s62
      %p69 = scmp.eq.s32.totalorder %s19, 1
      %p70 = por %p68, %p69
      %p71 = scmp.ne.s32.totalorder %s62, %s63
      %p72 = scmp.eq.s32.totalorder %s19, 0
      %p73 = por %p71, %p72
      %p74 = scmp.ne.s32.totalorder %s62, %s63
      %p75 = scmp.eq.s32.totalorder %s20, 1
      %p76 = por %p74, %p75
      %p78 = scmp.ne.s32.totalorder %s63, %s77
      %p79 = scmp.eq.s32.totalorder %s20, 0
      %p80 = por %p78, %p79
      %s81 = ssub.s32 %s21, %s33
      %p82 = scmp.eq.s32.totalorder %s81, 0
      %s84 = sadd.s32 %s83, 1
      %s85 = scalar_select %p82, %s83, %s84
      %p88 = pneg %p82
      %p89 = scmp.eq.s32.totalorder %s14, 1
      %p90 = por %p88, %p89
      %p91 = scmp.ne.s32.totalorder %s83, %s86
      %p92 = scmp.eq.s32.totalorder %s14, 0
      %p93 = por %p91, %p92
      %p94 = scmp.ne.s32.totalorder %s83, %s86
      %p95 = scmp.eq.s32.totalorder %s19, 1
      %p96 = por %p94, %p95
      %p97 = scmp.ne.s32.totalorder %s86, %s87
      %p98 = scmp.eq.s32.totalorder %s19, 0
      %p99 = por %p97, %p98
      %p100 = scmp.ne.s32.totalorder %s86, %s87
      %p101 = scmp.eq.s32.totalorder %s20, 1
      %p102 = por %p100, %p101
      %p104 = scmp.ne.s32.totalorder %s87, %s103
      %p105 = scmp.eq.s32.totalorder %s20, 0
      %p106 = por %p104, %p105
      %s107 = ssub.s32 %s22, %s29
      %s108 = ssub.s32 %s21, %s33
      %s109 = sor.u32 %s107, %s108
      %p110 = scmp.eq.s32.totalorder %s109, 0
      %s112 = sadd.s32 %s111, 1
      %s113 = scalar_select %p110, %s111, %s112
      %p116 = pneg %p110
      %p117 = scmp.eq.s32.totalorder %s14, 1
      %p118 = por %p116, %p117
      %p119 = scmp.ne.s32.totalorder %s111, %s114
      %p120 = scmp.eq.s32.totalorder %s14, 0
      %p121 = por %p119, %p120
      %p122 = scmp.ne.s32.totalorder %s111, %s114
      %p123 = scmp.eq.s32.totalorder %s19, 1
      %p124 = por %p122, %p123
      %p125 = scmp.ne.s32.totalorder %s114, %s115
      %p126 = scmp.eq.s32.totalorder %s19, 0
      %p127 = por %p125, %p126
      %p128 = scmp.ne.s32.totalorder %s114, %s115
      %p129 = scmp.eq.s32.totalorder %s20, 1
      %p130 = por %p128, %p129
      %p132 = scmp.ne.s32.totalorder %s115, %s131
      %p133 = scmp.eq.s32.totalorder %s20, 0
      %p134 = por %p132, %p133
      %p135 = scmp.le.s32.totalorder 1, %s14
      %p136 = scmp.lt.s32.totalorder %s14, 3
      %p137 = pnand %p135, %p136
      %p138 = pneg %p137
      // Predicated region
      $region9: #{tpu_custom_call.1} parent=5 // pred_check
        _
      $region10: #{tpu_custom_call.1} parent=5 // pred_check_branch
        %140 = sbr.rel (%p137) target = $region12
      $region11: #{tpu_custom_call.1} parent=5 // pred_region
        %s141 = ssub.s32 %s14, 1
        // Predicated region
        $region13: #{tpu_custom_call.1} parent=11 // pred_check
          %p142 = pneg %p52
        $region14: #{tpu_custom_call.1} parent=11 // pred_check_branch
          %144 = sbr.rel (%p142) target = $region16
        $region15: #{tpu_custom_call.1} parent=11 // pred_region
          %146 = vsyncadd [#allocation3], 0
          %s147 = smul.addr %s23, 2
          %s148 = scalar_lea.hbm %s0, %s147
          %s150 = sshll.u32 %s148, 4
          %s151 = int_to_ptr.hbm [resolvable:$true] %s150
          %s152 = sshll.u32 [#allocation2], 4
          %s153 = int_to_ptr.vmem [resolvable:$true] %s152
          %155 = dma.hbm_to_vmem [thread:$0]  %s151, 32, %s153, [#allocation3]
        $region16: #{tpu_custom_call.1} parent=11 // pred_fallthru
          _
        // Predicated region
        $region17: #{tpu_custom_call.1} parent=11 // pred_check
          %p156 = pneg %p73
        $region18: #{tpu_custom_call.1} parent=11 // pred_check_branch
          %158 = sbr.rel (%p156) target = $region20
        $region19: #{tpu_custom_call.1} parent=11 // pred_region
          %160 = vsyncadd [#allocation6], 0
          %s161 = sshll.u32 %s1, 4
          %s162 = int_to_ptr.hbm [resolvable:$true] %s161
          %s163 = sshll.u32 [#allocation5], 4
          %s164 = int_to_ptr.vmem [resolvable:$true] %s163
          %169 = dma.hbm_to_vmem [thread:$0]  %s162, 256, %s164, [#allocation6], 128, 128, 8
        $region20: #{tpu_custom_call.1} parent=11 // pred_fallthru
          _
        // Predicated region
        $region21: #{tpu_custom_call.1} parent=11 // pred_check
          %p170 = pneg %p99
        $region22: #{tpu_custom_call.1} parent=11 // pred_check_branch
          %172 = sbr.rel (%p170) target = $region24
        $region23: #{tpu_custom_call.1} parent=11 // pred_region
          %174 = vsyncadd [#allocation6], 0
          %s175 = smul.addr %s23, 8
          %s176 = scalar_lea.hbm %s2, %s175
          %s178 = sshll.u32 %s176, 4
          %s179 = int_to_ptr.hbm [resolvable:$true] %s178
          %s180 = sshll.u32 [#allocation7], 4
          %s181 = int_to_ptr.vmem [resolvable:$true] %s180
          %183 = dma.hbm_to_vmem [thread:$0]  %s179, 128, %s181, [#allocation6]
        $region24: #{tpu_custom_call.1} parent=11 // pred_fallthru
          _
      $region12: #{tpu_custom_call.1} parent=5 // pred_fallthru
        _
      %p184 = scmp.lt.s32.totalorder %s14, 2
      // Predicated region
      $region25: #{tpu_custom_call.1} parent=5 // pred_check
        %p185 = pneg %p184
      $region26: #{tpu_custom_call.1} parent=5 // pred_check_branch
        %187 = sbr.rel (%p185) target = $region28
      $region27: #{tpu_custom_call.1} parent=5 // pred_region
        _
      $region28: #{tpu_custom_call.1} parent=5 // pred_fallthru
        _
      %p188 = scmp.le.s32.totalorder 1, %s14
      %p189 = scmp.lt.s32.totalorder %s14, 3
      %p190 = pnand %p188, %p189
      %p191 = pneg %p190
      // Predicated region
      $region29: #{tpu_custom_call.1} parent=5 // pred_check
        _
      $region30: #{tpu_custom_call.1} parent=5 // pred_check_branch
        %193 = sbr.rel (%p190) target = $region32
      $region31: #{tpu_custom_call.1} parent=5 // pred_region
        %s194 = ssub.s32 %s14, 1
        // Predicated region
        $region33: #{tpu_custom_call.1} parent=31 // pred_check
          %p195 = pneg %p52
        $region34: #{tpu_custom_call.1} parent=31 // pred_check_branch
          %197 = sbr.rel (%p195) target = $region36
        $region35: #{tpu_custom_call.1} parent=31 // pred_region
          %199 = dma.done [#allocation3], 32
        $region36: #{tpu_custom_call.1} parent=31 // pred_fallthru
          _
        // Predicated region
        $region37: #{tpu_custom_call.1} parent=31 // pred_check
          %p200 = pneg %p73
        $region38: #{tpu_custom_call.1} parent=31 // pred_check_branch
          %202 = sbr.rel (%p200) target = $region40
        $region39: #{tpu_custom_call.1} parent=31 // pred_region
          %204 = dma.done [#allocation6], 256
        $region40: #{tpu_custom_call.1} parent=31 // pred_fallthru
          _
        // Predicated region
        $region41: #{tpu_custom_call.1} parent=31 // pred_check
          %p205 = pneg %p99
        $region42: #{tpu_custom_call.1} parent=31 // pred_check_branch
          %207 = sbr.rel (%p205) target = $region44
        $region43: #{tpu_custom_call.1} parent=31 // pred_region
          %209 = dma.done [#allocation6], 128
        $region44: #{tpu_custom_call.1} parent=31 // pred_fallthru
          _
        %p210 = pneg %p52
        %p211 = pneg %p49
        %p212 = pneg %p73
        %p213 = pneg %p70
        %p214 = pneg %p99
        %p215 = pneg %p96
        %p216 = pneg %p127
        %p217 = pneg %p124
        %s218 = sand.u32 %s114, 1
        %s219 = scalar_lea.sflag [#allocation4], %s218
        %s220 = sand.u32 %s114, 1
        %s221 = smul.addr %s220, 8
        %s222 = scalar_lea.vmem [#allocation8], %s221
        %s223 = scalar_lea.vmem [#allocation2], %s24
        %v224 = vld [vmem:[%s223] sm:$0x1]
        %v225 = vperm.slane %v224, 0
        %v226 = vlaneseq
        %v227 = vshrl.u32 %v226, 7
        %229 = vset.pattern.permute.xlu0 %v227
        %230 = vperm.xlu0 %229, %v225
        %v231 = vpop.permute.xlu0 %230
        %v232 = vlaneseq
        %v233 = vand.u32 %v232, 127
        %vm234 = vcmp.eq.s32.totalorder %v231, %v233
        %v235 = vsel %vm234, 1, 0
        %v236 = vcvt.s32.f32 %v235
        %v237 = vld [vmem:[#allocation5] sm:$0xff]
        %v238 = vld [vmem:[#allocation5 + $0x8] sm:$0xff]
        %vm239 = vcmask 130048
        %v241 = vsel %vm239, %v236, 0
        %243 = vmatpush.msra.mxu0 0.0
        %244 = vmatpush.msra.mxu0 0.0
        %245 = vmatpush.msra.mxu0 0.0
        %246 = vmatpush.msra.mxu0 0.0
        %247 = vmatpush.msra.mxu0 0.0
        %248 = vmatpush.msra.mxu0 0.0
        %249 = vmatpush.msra.mxu0 0.0
        %250 = vmatpush.msra.mxu0 0.0
        %251 = vmatpush.msra.mxu0 0.0
        %252 = vmatpush.msra.mxu0 0.0
        %253 = vmatpush.msra.mxu0 0.0
        %254 = vmatpush.msra.mxu0 0.0
        %255 = vmatpush.msra.mxu0 0.0
        %256 = vmatpush.msra.mxu0 0.0
        %v257 = vand.u32 %v238, 4294901760
        %258 = vmatpush.msra.mxu0 %v257
        %v259 = vand.u32 %v237, 4294901760
        %260 = vmatpush.msra.mxu0 %v259
        %v261 = vand.u32 %v241, 4294901760
        %v262 = vsub.f32 %v241, %v261
        %v263 = vand.u32 %v262, 4294901760
        %v264 = vsub.f32 %v262, %v263
        %v265 = vand.u32 %v264, 4294901760
        %266 = vmatmul.f32.gmra.mxu0 %v265
        %v267 = vpop.f32.mrf.mxu0
        %v268 = vadd.f32 0.0, %v267
        %269 = vdwg.mxu0
        %270 = vmatpush.msra.mxu0 0.0
        %271 = vmatpush.msra.mxu0 0.0
        %272 = vmatpush.msra.mxu0 0.0
        %273 = vmatpush.msra.mxu0 0.0
        %274 = vmatpush.msra.mxu0 0.0
        %275 = vmatpush.msra.mxu0 0.0
        %276 = vmatpush.msra.mxu0 0.0
        %277 = vmatpush.msra.mxu0 0.0
        %278 = vmatpush.msra.mxu0 0.0
        %279 = vmatpush.msra.mxu0 0.0
        %280 = vmatpush.msra.mxu0 0.0
        %281 = vmatpush.msra.mxu0 0.0
        %282 = vmatpush.msra.mxu0 0.0
        %283 = vmatpush.msra.mxu0 0.0
        %v284 = vand.u32 %v238, 4294901760
        %v285 = vsub.f32 %v238, %v284
        %v286 = vand.u32 %v285, 4294901760
        %v287 = vsub.f32 %v285, %v286
        %v288 = vand.u32 %v287, 4294901760
        %289 = vmatpush.msra.mxu0 %v288
        %v290 = vand.u32 %v237, 4294901760
        %v291 = vsub.f32 %v237, %v290
        %v292 = vand.u32 %v291, 4294901760
        %v293 = vsub.f32 %v291, %v292
        %v294 = vand.u32 %v293, 4294901760
        %295 = vmatpush.msra.mxu0 %v294
        %v296 = vand.u32 %v241, 4294901760
        %297 = vmatmul.f32.gmra.mxu0 %v296
        %v298 = vpop.f32.mrf.mxu0
        %v299 = vadd.f32 %v268, %v298
        %300 = vdwg.mxu0
        %301 = vmatpush.msra.mxu0 0.0
        %302 = vmatpush.msra.mxu0 0.0
        %303 = vmatpush.msra.mxu0 0.0
        %304 = vmatpush.msra.mxu0 0.0
        %305 = vmatpush.msra.mxu0 0.0
        %306 = vmatpush.msra.mxu0 0.0
        %307 = vmatpush.msra.mxu0 0.0
        %308 = vmatpush.msra.mxu0 0.0
        %309 = vmatpush.msra.mxu0 0.0
        %310 = vmatpush.msra.mxu0 0.0
        %311 = vmatpush.msra.mxu0 0.0
        %312 = vmatpush.msra.mxu0 0.0
        %313 = vmatpush.msra.mxu0 0.0
        %314 = vmatpush.msra.mxu0 0.0
        %v315 = vand.u32 %v238, 4294901760
        %v316 = vsub.f32 %v238, %v315
        %317 = vmatpush.msra.mxu0 %v316
        %v318 = vand.u32 %v237, 4294901760
        %v319 = vsub.f32 %v237, %v318
        %320 = vmatpush.msra.mxu0 %v319
        %v321 = vand.u32 %v241, 4294901760
        %v322 = vsub.f32 %v241, %v321
        %323 = vmatmul.f32.gmra.mxu0 %v322
        %v324 = vpop.f32.mrf.mxu0
        %v325 = vadd.f32 %v299, %v324
        %326 = vdwg.mxu0
        %327 = vmatpush.msra.mxu0 0.0
        %328 = vmatpush.msra.mxu0 0.0
        %329 = vmatpush.msra.mxu0 0.0
        %330 = vmatpush.msra.mxu0 0.0
        %331 = vmatpush.msra.mxu0 0.0
        %332 = vmatpush.msra.mxu0 0.0
        %333 = vmatpush.msra.mxu0 0.0
        %334 = vmatpush.msra.mxu0 0.0
        %335 = vmatpush.msra.mxu0 0.0
        %336 = vmatpush.msra.mxu0 0.0
        %337 = vmatpush.msra.mxu0 0.0
        %338 = vmatpush.msra.mxu0 0.0
        %339 = vmatpush.msra.mxu0 0.0
        %340 = vmatpush.msra.mxu0 0.0
        %v341 = vand.u32 %v238, 4294901760
        %342 = vmatpush.msra.mxu0 %v341
        %v343 = vand.u32 %v237, 4294901760
        %344 = vmatpush.msra.mxu0 %v343
        %v345 = vand.u32 %v241, 4294901760
        %v346 = vsub.f32 %v241, %v345
        %v347 = vand.u32 %v346, 4294901760
        %348 = vmatmul.f32.gmra.mxu0 %v347
        %v349 = vpop.f32.mrf.mxu0
        %v350 = vadd.f32 %v325, %v349
        %351 = vdwg.mxu0
        %352 = vmatpush.msra.mxu0 0.0
        %353 = vmatpush.msra.mxu0 0.0
        %354 = vmatpush.msra.mxu0 0.0
        %355 = vmatpush.msra.mxu0 0.0
        %356 = vmatpush.msra.mxu0 0.0
        %357 = vmatpush.msra.mxu0 0.0
        %358 = vmatpush.msra.mxu0 0.0
        %359 = vmatpush.msra.mxu0 0.0
        %360 = vmatpush.msra.mxu0 0.0
        %361 = vmatpush.msra.mxu0 0.0
        %362 = vmatpush.msra.mxu0 0.0
        %363 = vmatpush.msra.mxu0 0.0
        %364 = vmatpush.msra.mxu0 0.0
        %365 = vmatpush.msra.mxu0 0.0
        %v366 = vand.u32 %v238, 4294901760
        %v367 = vsub.f32 %v238, %v366
        %v368 = vand.u32 %v367, 4294901760
        %369 = vmatpush.msra.mxu0 %v368
        %v370 = vand.u32 %v237, 4294901760
        %v371 = vsub.f32 %v237, %v370
        %v372 = vand.u32 %v371, 4294901760
        %373 = vmatpush.msra.mxu0 %v372
        %v374 = vand.u32 %v241, 4294901760
        %375 = vmatmul.f32.gmra.mxu0 %v374
        %v376 = vpop.f32.mrf.mxu0
        %v377 = vadd.f32 %v350, %v376
        %378 = vdwg.mxu0
        %379 = vmatpush.msra.mxu0 0.0
        %380 = vmatpush.msra.mxu0 0.0
        %381 = vmatpush.msra.mxu0 0.0
        %382 = vmatpush.msra.mxu0 0.0
        %383 = vmatpush.msra.mxu0 0.0
        %384 = vmatpush.msra.mxu0 0.0
        %385 = vmatpush.msra.mxu0 0.0
        %386 = vmatpush.msra.mxu0 0.0
        %387 = vmatpush.msra.mxu0 0.0
        %388 = vmatpush.msra.mxu0 0.0
        %389 = vmatpush.msra.mxu0 0.0
        %390 = vmatpush.msra.mxu0 0.0
        %391 = vmatpush.msra.mxu0 0.0
        %392 = vmatpush.msra.mxu0 0.0
        %v393 = vand.u32 %v238, 4294901760
        %394 = vmatpush.msra.mxu0 %v393
        %v395 = vand.u32 %v237, 4294901760
        %396 = vmatpush.msra.mxu0 %v395
        %v397 = vand.u32 %v241, 4294901760
        %398 = vmatmul.f32.gmra.mxu0 %v397
        %v399 = vpop.f32.mrf.mxu0
        %v400 = vadd.f32 %v377, %v399
        %401 = vdwg.mxu0
        %v402 = vmul.f32 %v400, 5.656854
        %v403 = vld [vmem:[#allocation7] sm:$0xff]
        %v404 = vadd.f32 %v402, %v403
        %vm405 = vcmask 261120
        %406 = vst.msk [vmem:[%s222] sm:$0xff] %vm405, %v404
        %s407 = sand.u32 %s114, 1
        %s408 = scalar_lea.sflag [#allocation4], %s407
        %s409 = sand.u32 %s114, 1
        %s410 = smul.addr %s409, 8
        %s411 = scalar_lea.vmem [#allocation8], %s410
        // Predicated region
        $region45: #{tpu_custom_call.1} parent=31 // pred_check
          %p412 = pneg %p124
        $region46: #{tpu_custom_call.1} parent=31 // pred_check_branch
          %414 = sbr.rel (%p412) target = $region48
        $region47: #{tpu_custom_call.1} parent=31 // pred_region
          %416 = vsyncadd %s408, 0
          %s417 = sadd.s32 %s23, %s24
          %s418 = smul.addr %s417, 8
          %s419 = scalar_lea.hbm %s3, %s418
          %s421 = sshll.u32 %s411, 4
          %s422 = int_to_ptr.vmem [resolvable:$true] %s421
          %s423 = sshll.u32 %s419, 4
          %s424 = int_to_ptr.hbm [resolvable:$true] %s423
          %426 = dma.vmem_to_hbm [thread:$0]  %s422, 128, %s424, %s408
        $region48: #{tpu_custom_call.1} parent=31 // pred_fallthru
          _
      $region32: #{tpu_custom_call.1} parent=5 // pred_fallthru
        _
      %p427 = scmp.le.s32.totalorder 2, %s14
      // Predicated region
      $region49: #{tpu_custom_call.1} parent=5 // pred_check
        %p428 = pneg %p427
      $region50: #{tpu_custom_call.1} parent=5 // pred_check_branch
        %430 = sbr.rel (%p428) target = $region52
      $region51: #{tpu_custom_call.1} parent=5 // pred_region
        %s431 = ssub.s32 %s14, 2
        // Predicated region
        $region53: #{tpu_custom_call.1} parent=51 // pred_check
          %p432 = pneg %p130
        $region54: #{tpu_custom_call.1} parent=51 // pred_check_branch
          %434 = sbr.rel (%p432) target = $region56
        $region55: #{tpu_custom_call.1} parent=51 // pred_region
          %s435 = sand.u32 %s115, 1
          %s436 = scalar_lea.sflag [#allocation4], %s435
          %s437 = sand.u32 %s115, 1
          %s438 = smul.addr %s437, 8
          %s439 = scalar_lea.vmem [#allocation8], %s438
          %441 = dma.done %s436, 128
        $region56: #{tpu_custom_call.1} parent=51 // pred_fallthru
          _
      $region52: #{tpu_custom_call.1} parent=5 // pred_fallthru
        _
    $region6: #{tpu_custom_call.1} parent=1 // loop_footer
      %s18 = sadd.s32 1, %s14
    $region7: #{tpu_custom_call.1} parent=1 // loop_footer_branch
      %13 = sbr.rel target = $region3
    $region8: #{tpu_custom_call.1} parent=1 // loop_exit
      _
    %442 = vsyncpa [#allocation3], 1
    %s443 = scalar_lea.sflag [#allocation3], 1
    %444 = vsyncpa %s443, 1
    %445 = vsyncpa [#allocation6], 1
    %446 = vsyncpa [#allocation4], 1
    %s447 = scalar_lea.sflag [#allocation4], 1
    %448 = vsyncpa %s447, 1

</llo_original>
